<compile_context>
chip_gen: v7x
topology: tpu7x:2x2x1
jax: 0.10.0
libtpu: 0.0.40
codegen_flags: <defaults>
</compile_context>

<pallas_src>
import jax
import jax.numpy as jnp
from jax.experimental import pallas as pl
from jax.experimental.pallas import tpu as pltpu


def _embedding_kernel(idx_ref, we_hbm, wo_t_ref, o_ref, emb_buf, sems):
    """One grid step = one vocab tile of the output projection.

    idx_ref : SMEM (N,) int32        token ids (scalar prefetch)
    we_hbm  : HBM  (V, D)            embedding table We^T (memory_space=pl.ANY)
    wo_t_ref: VMEM (D, TN)           current streamed tile of Wo^T
    o_ref   : VMEM (1, TN)           current output tile
    emb_buf : VMEM (N, D) scratch    gathered embedding rows
    sems    : DMA semaphores (N,)
    """
    n = emb_buf.shape[0]

    # ---- gather: x @ We^T with one-hot x is just N row reads of We^T -------
    copies = []
    for i in range(n):  # N is small & static -> unrolled row DMAs
        cp = pltpu.make_async_copy(
            we_hbm.at[pl.ds(idx_ref[i], 1), :],   # (1, D) row of We^T
            emb_buf.at[pl.ds(i, 1), :],
            sems.at[i],
        )
        cp.start()
        copies.append(cp)
    for cp in copies:
        cp.wait()

    # ---- mean over the N inputs (mean commutes with the linear layers) -----
    ave = jnp.mean(emb_buf[...].astype(jnp.float32), axis=0, keepdims=True)  # (1, D)

    # ---- output projection for this vocab tile: (1, D) @ (D, TN) on MXU ----
    out = jnp.dot(
        ave.astype(wo_t_ref.dtype),
        wo_t_ref[...],
        preferred_element_type=jnp.float32,
    )
    o_ref[...] = out.astype(o_ref.dtype)


def _pick_vocab_tile(v_size, d_size, itemsize, max_tile_bytes=16 * 1024 * 1024):
    """Lane-dense vocab tile (multiple of 128) sized so the double-buffered
    (D, TN) Wo^T tile stays well inside v7x's 64 MiB physical VMEM."""
    if v_size % 128 != 0:
        return v_size  # tiny / odd vocab: single full-width block
    tn_cap = max(128, max_tile_bytes // (2 * d_size * itemsize))
    tn = min(v_size, (tn_cap // 128) * 128)
    tn = max(tn, 128)
    while v_size % tn != 0:
        tn -= 128
    return tn


def my_embedding_forward(idx, we_t, wo_t, out_dtype=jnp.float32):
    """Forward pass of myEmbedding.

    idx : (N,)  int token ids (the argmax of the one-hot inputs)
    we_t: (V, D) embed_layer.weight.T   (f32 or bf16)
    wo_t: (D, V) out_layer.weight.T     (f32 or bf16)
    returns (1, V) float32  ==  mean_n(onehot(idx[n]) @ We^T) @ Wo^T
    """
    n = idx.shape[0]
    v_size, d_size = we_t.shape
    assert wo_t.shape == (d_size, v_size)

    tn = _pick_vocab_tile(v_size, d_size, jnp.dtype(wo_t.dtype).itemsize)
    num_tiles = v_size // tn

    grid_spec = pltpu.PrefetchScalarGridSpec(
        num_scalar_prefetch=1,          # idx -> SMEM before the grid runs
        grid=(num_tiles,),
        in_specs=[
            pl.BlockSpec(memory_space=pl.ANY),                       # We^T stays in HBM
            pl.BlockSpec((d_size, tn), lambda j, _idx: (0, j)),      # stream Wo^T tiles
        ],
        out_specs=pl.BlockSpec((1, tn), lambda j, _idx: (0, j)),
        scratch_shapes=[
            pltpu.VMEM((n, d_size), we_t.dtype),    # gathered embedding rows
            pltpu.SemaphoreType.DMA((n,)),
        ],
    )

    # TODO(synk): if several sequences/queries are available, batch them so the
    # projection has M >= 8 rows and each streamed Wo tile is reused B times.
    return pl.pallas_call(
        _embedding_kernel,
        out_shape=jax.ShapeDtypeStruct((1, v_size), out_dtype),
        grid_spec=grid_spec,
        compiler_params=pltpu.CompilerParams(
            dimension_semantics=("parallel",),   # independent vocab tiles (v7x megacore)
            vmem_limit_bytes=64 * 1024 * 1024,
        ),
    )(idx.astype(jnp.int32), we_t, wo_t)


def my_embedding_forward_onehot(x_onehot, we_t, wo_t):
    """Convenience wrapper matching the PyTorch module interface exactly:
    takes the one-hot input rows and converts them to indices outside the kernel."""
    idx = jnp.argmax(x_onehot, axis=-1).astype(jnp.int32)
    return my_embedding_forward(idx, we_t, wo_t)


if __name__ == "__main__":
    # Small shapes consistent with the module: N one-hot vectors over the vocab.
    N = 8          # number of inputs in the sequence
    V_SIZE = 256   # vocabulary size (lane-dense: multiple of 128)
    D_SIZE = 32    # embedding dimension

    key = jax.random.PRNGKey(0)
    k_we, k_wo, k_idx = jax.random.split(key, 3)

    # Deterministic init mimicking nn.Linear's uniform(-1/sqrt(fan_in), +1/sqrt(fan_in)).
    we = jax.random.uniform(k_we, (D_SIZE, V_SIZE), jnp.float32,
                            minval=-1.0 / jnp.sqrt(V_SIZE), maxval=1.0 / jnp.sqrt(V_SIZE))
    wo = jax.random.uniform(k_wo, (V_SIZE, D_SIZE), jnp.float32,
                            minval=-1.0 / jnp.sqrt(D_SIZE), maxval=1.0 / jnp.sqrt(D_SIZE))

    # Example inputs: N one-hot vectors over the vocabulary (and their ids).
    idx = jax.random.randint(k_idx, (N,), 0, V_SIZE)
    x = jax.nn.one_hot(idx, V_SIZE, dtype=jnp.float32)   # (N, V_SIZE)

    out = my_embedding_forward(idx, we.T, wo.T)
    out = jax.block_until_ready(out)

    # Reference in plain JAX (same math as the PyTorch forward).
    ref = jnp.mean(x @ we.T, axis=0, keepdims=True) @ wo.T
    assert out.shape == (1, V_SIZE)
    assert jnp.allclose(out, ref, atol=1e-5, rtol=1e-5)

    print("KERNEL_OK")
</pallas_src>

<mosaic_0001>
module attributes {stable_mosaic.version = 11 : i64} {
  func.func @_embedding_kernel(%arg0: i32, %arg1: memref<8xi32, #tpu.memory_space<smem>>, %arg2: memref<256x32xf32, #tpu.memory_space<any>>, %arg3: memref<32x256xf32, #tpu.memory_space<vmem>>, %arg4: memref<1x256xf32, #tpu.memory_space<vmem>>, %arg5: memref<8x32xf32, #tpu.memory_space<vmem>>, %arg6: memref<8x!tpu.dma_semaphore, #tpu.memory_space<semaphore_mem>>) attributes {dimension_semantics = [#tpu.dimension_semantics<parallel>], iteration_bounds = array<i64: 1>, scalar_prefetch = 1 : i64, scratch_operands = 2 : i64, tpu.core_type = #tpu.core_type<tc>, window_params = [{}, {transform_indices = @transform_1, window_bounds = array<i64: 32, 256>}, {transform_indices = @transform_2, window_bounds = array<i64: 1, 256>}]} {
    %c0 = arith.constant 0 : index
    %0 = memref.load %arg1[%c0] : memref<8xi32, #tpu.memory_space<smem>>
    %c0_i32 = arith.constant 0 : i32
    %c0_i32_0 = arith.constant 0 : i32
    %1 = tpu.memref_slice %arg2[%0, %c0_i32_0] : memref<256x32xf32, #tpu.memory_space<any>> -> memref<1x32xf32, #tpu.memory_space<any>>
    %c0_i32_1 = arith.constant 0 : i32
    %c0_i32_2 = arith.constant 0 : i32
    %2 = tpu.memref_slice %arg5[%c0_i32_1, %c0_i32_2] : memref<8x32xf32, #tpu.memory_space<vmem>> -> memref<1x32xf32, #tpu.memory_space<vmem>>
    %3 = tpu.memref_slice %arg6[%c0_i32] : memref<8x!tpu.dma_semaphore, #tpu.memory_space<semaphore_mem>> -> memref<1x!tpu.dma_semaphore, #tpu.memory_space<semaphore_mem>>
    %4 = tpu.memref_squeeze %3 : memref<1x!tpu.dma_semaphore, #tpu.memory_space<semaphore_mem>> -> memref<!tpu.dma_semaphore, #tpu.memory_space<semaphore_mem>>
    tpu.enqueue_dma source(%1 : memref<1x32xf32, #tpu.memory_space<any>>) target(%2 : memref<1x32xf32, #tpu.memory_space<vmem>>) target_semaphore(%4 : memref<!tpu.dma_semaphore, #tpu.memory_space<semaphore_mem>>)
    %c1 = arith.constant 1 : index
    %5 = memref.load %arg1[%c1] : memref<8xi32, #tpu.memory_space<smem>>
    %c1_i32 = arith.constant 1 : i32
    %c0_i32_3 = arith.constant 0 : i32
    %6 = tpu.memref_slice %arg2[%5, %c0_i32_3] : memref<256x32xf32, #tpu.memory_space<any>> -> memref<1x32xf32, #tpu.memory_space<any>>
    %c1_i32_4 = arith.constant 1 : i32
    %c0_i32_5 = arith.constant 0 : i32
    %7 = tpu.memref_slice %arg5[%c1_i32_4, %c0_i32_5] : memref<8x32xf32, #tpu.memory_space<vmem>> -> memref<1x32xf32, #tpu.memory_space<vmem>>
    %8 = tpu.memref_slice %arg6[%c1_i32] : memref<8x!tpu.dma_semaphore, #tpu.memory_space<semaphore_mem>> -> memref<1x!tpu.dma_semaphore, #tpu.memory_space<semaphore_mem>>
    %9 = tpu.memref_squeeze %8 : memref<1x!tpu.dma_semaphore, #tpu.memory_space<semaphore_mem>> -> memref<!tpu.dma_semaphore, #tpu.memory_space<semaphore_mem>>
    tpu.enqueue_dma source(%6 : memref<1x32xf32, #tpu.memory_space<any>>) target(%7 : memref<1x32xf32, #tpu.memory_space<vmem>>) target_semaphore(%9 : memref<!tpu.dma_semaphore, #tpu.memory_space<semaphore_mem>>)
    %c2 = arith.constant 2 : index
    %10 = memref.load %arg1[%c2] : memref<8xi32, #tpu.memory_space<smem>>
    %c2_i32 = arith.constant 2 : i32
    %c0_i32_6 = arith.constant 0 : i32
    %11 = tpu.memref_slice %arg2[%10, %c0_i32_6] : memref<256x32xf32, #tpu.memory_space<any>> -> memref<1x32xf32, #tpu.memory_space<any>>
    %c2_i32_7 = arith.constant 2 : i32
    %c0_i32_8 = arith.constant 0 : i32
    %12 = tpu.memref_slice %arg5[%c2_i32_7, %c0_i32_8] : memref<8x32xf32, #tpu.memory_space<vmem>> -> memref<1x32xf32, #tpu.memory_space<vmem>>
    %13 = tpu.memref_slice %arg6[%c2_i32] : memref<8x!tpu.dma_semaphore, #tpu.memory_space<semaphore_mem>> -> memref<1x!tpu.dma_semaphore, #tpu.memory_space<semaphore_mem>>
    %14 = tpu.memref_squeeze %13 : memref<1x!tpu.dma_semaphore, #tpu.memory_space<semaphore_mem>> -> memref<!tpu.dma_semaphore, #tpu.memory_space<semaphore_mem>>
    tpu.enqueue_dma source(%11 : memref<1x32xf32, #tpu.memory_space<any>>) target(%12 : memref<1x32xf32, #tpu.memory_space<vmem>>) target_semaphore(%14 : memref<!tpu.dma_semaphore, #tpu.memory_space<semaphore_mem>>)
    %c3 = arith.constant 3 : index
    %15 = memref.load %arg1[%c3] : memref<8xi32, #tpu.memory_space<smem>>
    %c3_i32 = arith.constant 3 : i32
    %c0_i32_9 = arith.constant 0 : i32
    %16 = tpu.memref_slice %arg2[%15, %c0_i32_9] : memref<256x32xf32, #tpu.memory_space<any>> -> memref<1x32xf32, #tpu.memory_space<any>>
    %c3_i32_10 = arith.constant 3 : i32
    %c0_i32_11 = arith.constant 0 : i32
    %17 = tpu.memref_slice %arg5[%c3_i32_10, %c0_i32_11] : memref<8x32xf32, #tpu.memory_space<vmem>> -> memref<1x32xf32, #tpu.memory_space<vmem>>
    %18 = tpu.memref_slice %arg6[%c3_i32] : memref<8x!tpu.dma_semaphore, #tpu.memory_space<semaphore_mem>> -> memref<1x!tpu.dma_semaphore, #tpu.memory_space<semaphore_mem>>
    %19 = tpu.memref_squeeze %18 : memref<1x!tpu.dma_semaphore, #tpu.memory_space<semaphore_mem>> -> memref<!tpu.dma_semaphore, #tpu.memory_space<semaphore_mem>>
    tpu.enqueue_dma source(%16 : memref<1x32xf32, #tpu.memory_space<any>>) target(%17 : memref<1x32xf32, #tpu.memory_space<vmem>>) target_semaphore(%19 : memref<!tpu.dma_semaphore, #tpu.memory_space<semaphore_mem>>)
    %c4 = arith.constant 4 : index
    %20 = memref.load %arg1[%c4] : memref<8xi32, #tpu.memory_space<smem>>
    %c4_i32 = arith.constant 4 : i32
    %c0_i32_12 = arith.constant 0 : i32
    %21 = tpu.memref_slice %arg2[%20, %c0_i32_12] : memref<256x32xf32, #tpu.memory_space<any>> -> memref<1x32xf32, #tpu.memory_space<any>>
    %c4_i32_13 = arith.constant 4 : i32
    %c0_i32_14 = arith.constant 0 : i32
    %22 = tpu.memref_slice %arg5[%c4_i32_13, %c0_i32_14] : memref<8x32xf32, #tpu.memory_space<vmem>> -> memref<1x32xf32, #tpu.memory_space<vmem>>
    %23 = tpu.memref_slice %arg6[%c4_i32] : memref<8x!tpu.dma_semaphore, #tpu.memory_space<semaphore_mem>> -> memref<1x!tpu.dma_semaphore, #tpu.memory_space<semaphore_mem>>
    %24 = tpu.memref_squeeze %23 : memref<1x!tpu.dma_semaphore, #tpu.memory_space<semaphore_mem>> -> memref<!tpu.dma_semaphore, #tpu.memory_space<semaphore_mem>>
    tpu.enqueue_dma source(%21 : memref<1x32xf32, #tpu.memory_space<any>>) target(%22 : memref<1x32xf32, #tpu.memory_space<vmem>>) target_semaphore(%24 : memref<!tpu.dma_semaphore, #tpu.memory_space<semaphore_mem>>)
    %c5 = arith.constant 5 : index
    %25 = memref.load %arg1[%c5] : memref<8xi32, #tpu.memory_space<smem>>
    %c5_i32 = arith.constant 5 : i32
    %c0_i32_15 = arith.constant 0 : i32
    %26 = tpu.memref_slice %arg2[%25, %c0_i32_15] : memref<256x32xf32, #tpu.memory_space<any>> -> memref<1x32xf32, #tpu.memory_space<any>>
    %c5_i32_16 = arith.constant 5 : i32
    %c0_i32_17 = arith.constant 0 : i32
    %27 = tpu.memref_slice %arg5[%c5_i32_16, %c0_i32_17] : memref<8x32xf32, #tpu.memory_space<vmem>> -> memref<1x32xf32, #tpu.memory_space<vmem>>
    %28 = tpu.memref_slice %arg6[%c5_i32] : memref<8x!tpu.dma_semaphore, #tpu.memory_space<semaphore_mem>> -> memref<1x!tpu.dma_semaphore, #tpu.memory_space<semaphore_mem>>
    %29 = tpu.memref_squeeze %28 : memref<1x!tpu.dma_semaphore, #tpu.memory_space<semaphore_mem>> -> memref<!tpu.dma_semaphore, #tpu.memory_space<semaphore_mem>>
    tpu.enqueue_dma source(%26 : memref<1x32xf32, #tpu.memory_space<any>>) target(%27 : memref<1x32xf32, #tpu.memory_space<vmem>>) target_semaphore(%29 : memref<!tpu.dma_semaphore, #tpu.memory_space<semaphore_mem>>)
    %c6 = arith.constant 6 : index
    %30 = memref.load %arg1[%c6] : memref<8xi32, #tpu.memory_space<smem>>
    %c6_i32 = arith.constant 6 : i32
    %c0_i32_18 = arith.constant 0 : i32
    %31 = tpu.memref_slice %arg2[%30, %c0_i32_18] : memref<256x32xf32, #tpu.memory_space<any>> -> memref<1x32xf32, #tpu.memory_space<any>>
    %c6_i32_19 = arith.constant 6 : i32
    %c0_i32_20 = arith.constant 0 : i32
    %32 = tpu.memref_slice %arg5[%c6_i32_19, %c0_i32_20] : memref<8x32xf32, #tpu.memory_space<vmem>> -> memref<1x32xf32, #tpu.memory_space<vmem>>
    %33 = tpu.memref_slice %arg6[%c6_i32] : memref<8x!tpu.dma_semaphore, #tpu.memory_space<semaphore_mem>> -> memref<1x!tpu.dma_semaphore, #tpu.memory_space<semaphore_mem>>
    %34 = tpu.memref_squeeze %33 : memref<1x!tpu.dma_semaphore, #tpu.memory_space<semaphore_mem>> -> memref<!tpu.dma_semaphore, #tpu.memory_space<semaphore_mem>>
    tpu.enqueue_dma source(%31 : memref<1x32xf32, #tpu.memory_space<any>>) target(%32 : memref<1x32xf32, #tpu.memory_space<vmem>>) target_semaphore(%34 : memref<!tpu.dma_semaphore, #tpu.memory_space<semaphore_mem>>)
    %c7 = arith.constant 7 : index
    %35 = memref.load %arg1[%c7] : memref<8xi32, #tpu.memory_space<smem>>
    %c7_i32 = arith.constant 7 : i32
    %c0_i32_21 = arith.constant 0 : i32
    %36 = tpu.memref_slice %arg2[%35, %c0_i32_21] : memref<256x32xf32, #tpu.memory_space<any>> -> memref<1x32xf32, #tpu.memory_space<any>>
    %c7_i32_22 = arith.constant 7 : i32
    %c0_i32_23 = arith.constant 0 : i32
    %37 = tpu.memref_slice %arg5[%c7_i32_22, %c0_i32_23] : memref<8x32xf32, #tpu.memory_space<vmem>> -> memref<1x32xf32, #tpu.memory_space<vmem>>
    %38 = tpu.memref_slice %arg6[%c7_i32] : memref<8x!tpu.dma_semaphore, #tpu.memory_space<semaphore_mem>> -> memref<1x!tpu.dma_semaphore, #tpu.memory_space<semaphore_mem>>
    %39 = tpu.memref_squeeze %38 : memref<1x!tpu.dma_semaphore, #tpu.memory_space<semaphore_mem>> -> memref<!tpu.dma_semaphore, #tpu.memory_space<semaphore_mem>>
    tpu.enqueue_dma source(%36 : memref<1x32xf32, #tpu.memory_space<any>>) target(%37 : memref<1x32xf32, #tpu.memory_space<vmem>>) target_semaphore(%39 : memref<!tpu.dma_semaphore, #tpu.memory_space<semaphore_mem>>)
    %c0_i32_24 = arith.constant 0 : i32
    %c0_i32_25 = arith.constant 0 : i32
    %40 = tpu.memref_slice %arg2[%0, %c0_i32_25] : memref<256x32xf32, #tpu.memory_space<any>> -> memref<1x32xf32, #tpu.memory_space<any>>
    %c0_i32_26 = arith.constant 0 : i32
    %c0_i32_27 = arith.constant 0 : i32
    %41 = tpu.memref_slice %arg5[%c0_i32_26, %c0_i32_27] : memref<8x32xf32, #tpu.memory_space<vmem>> -> memref<1x32xf32, #tpu.memory_space<vmem>>
    %42 = tpu.memref_slice %arg6[%c0_i32_24] : memref<8x!tpu.dma_semaphore, #tpu.memory_space<semaphore_mem>> -> memref<1x!tpu.dma_semaphore, #tpu.memory_space<semaphore_mem>>
    %43 = tpu.memref_squeeze %42 : memref<1x!tpu.dma_semaphore, #tpu.memory_space<semaphore_mem>> -> memref<!tpu.dma_semaphore, #tpu.memory_space<semaphore_mem>>
    tpu.wait_dma2 semaphore(%43 : memref<!tpu.dma_semaphore, #tpu.memory_space<semaphore_mem>>) src(%40 : memref<1x32xf32, #tpu.memory_space<any>>) dst(%41 : memref<1x32xf32, #tpu.memory_space<vmem>>)
    %c1_i32_28 = arith.constant 1 : i32
    %c0_i32_29 = arith.constant 0 : i32
    %44 = tpu.memref_slice %arg2[%5, %c0_i32_29] : memref<256x32xf32, #tpu.memory_space<any>> -> memref<1x32xf32, #tpu.memory_space<any>>
    %c1_i32_30 = arith.constant 1 : i32
    %c0_i32_31 = arith.constant 0 : i32
    %45 = tpu.memref_slice %arg5[%c1_i32_30, %c0_i32_31] : memref<8x32xf32, #tpu.memory_space<vmem>> -> memref<1x32xf32, #tpu.memory_space<vmem>>
    %46 = tpu.memref_slice %arg6[%c1_i32_28] : memref<8x!tpu.dma_semaphore, #tpu.memory_space<semaphore_mem>> -> memref<1x!tpu.dma_semaphore, #tpu.memory_space<semaphore_mem>>
    %47 = tpu.memref_squeeze %46 : memref<1x!tpu.dma_semaphore, #tpu.memory_space<semaphore_mem>> -> memref<!tpu.dma_semaphore, #tpu.memory_space<semaphore_mem>>
    tpu.wait_dma2 semaphore(%47 : memref<!tpu.dma_semaphore, #tpu.memory_space<semaphore_mem>>) src(%44 : memref<1x32xf32, #tpu.memory_space<any>>) dst(%45 : memref<1x32xf32, #tpu.memory_space<vmem>>)
    %c2_i32_32 = arith.constant 2 : i32
    %c0_i32_33 = arith.constant 0 : i32
    %48 = tpu.memref_slice %arg2[%10, %c0_i32_33] : memref<256x32xf32, #tpu.memory_space<any>> -> memref<1x32xf32, #tpu.memory_space<any>>
    %c2_i32_34 = arith.constant 2 : i32
    %c0_i32_35 = arith.constant 0 : i32
    %49 = tpu.memref_slice %arg5[%c2_i32_34, %c0_i32_35] : memref<8x32xf32, #tpu.memory_space<vmem>> -> memref<1x32xf32, #tpu.memory_space<vmem>>
    %50 = tpu.memref_slice %arg6[%c2_i32_32] : memref<8x!tpu.dma_semaphore, #tpu.memory_space<semaphore_mem>> -> memref<1x!tpu.dma_semaphore, #tpu.memory_space<semaphore_mem>>
    %51 = tpu.memref_squeeze %50 : memref<1x!tpu.dma_semaphore, #tpu.memory_space<semaphore_mem>> -> memref<!tpu.dma_semaphore, #tpu.memory_space<semaphore_mem>>
    tpu.wait_dma2 semaphore(%51 : memref<!tpu.dma_semaphore, #tpu.memory_space<semaphore_mem>>) src(%48 : memref<1x32xf32, #tpu.memory_space<any>>) dst(%49 : memref<1x32xf32, #tpu.memory_space<vmem>>)
    %c3_i32_36 = arith.constant 3 : i32
    %c0_i32_37 = arith.constant 0 : i32
    %52 = tpu.memref_slice %arg2[%15, %c0_i32_37] : memref<256x32xf32, #tpu.memory_space<any>> -> memref<1x32xf32, #tpu.memory_space<any>>
    %c3_i32_38 = arith.constant 3 : i32
    %c0_i32_39 = arith.constant 0 : i32
    %53 = tpu.memref_slice %arg5[%c3_i32_38, %c0_i32_39] : memref<8x32xf32, #tpu.memory_space<vmem>> -> memref<1x32xf32, #tpu.memory_space<vmem>>
    %54 = tpu.memref_slice %arg6[%c3_i32_36] : memref<8x!tpu.dma_semaphore, #tpu.memory_space<semaphore_mem>> -> memref<1x!tpu.dma_semaphore, #tpu.memory_space<semaphore_mem>>
    %55 = tpu.memref_squeeze %54 : memref<1x!tpu.dma_semaphore, #tpu.memory_space<semaphore_mem>> -> memref<!tpu.dma_semaphore, #tpu.memory_space<semaphore_mem>>
    tpu.wait_dma2 semaphore(%55 : memref<!tpu.dma_semaphore, #tpu.memory_space<semaphore_mem>>) src(%52 : memref<1x32xf32, #tpu.memory_space<any>>) dst(%53 : memref<1x32xf32, #tpu.memory_space<vmem>>)
    %c4_i32_40 = arith.constant 4 : i32
    %c0_i32_41 = arith.constant 0 : i32
    %56 = tpu.memref_slice %arg2[%20, %c0_i32_41] : memref<256x32xf32, #tpu.memory_space<any>> -> memref<1x32xf32, #tpu.memory_space<any>>
    %c4_i32_42 = arith.constant 4 : i32
    %c0_i32_43 = arith.constant 0 : i32
    %57 = tpu.memref_slice %arg5[%c4_i32_42, %c0_i32_43] : memref<8x32xf32, #tpu.memory_space<vmem>> -> memref<1x32xf32, #tpu.memory_space<vmem>>
    %58 = tpu.memref_slice %arg6[%c4_i32_40] : memref<8x!tpu.dma_semaphore, #tpu.memory_space<semaphore_mem>> -> memref<1x!tpu.dma_semaphore, #tpu.memory_space<semaphore_mem>>
    %59 = tpu.memref_squeeze %58 : memref<1x!tpu.dma_semaphore, #tpu.memory_space<semaphore_mem>> -> memref<!tpu.dma_semaphore, #tpu.memory_space<semaphore_mem>>
    tpu.wait_dma2 semaphore(%59 : memref<!tpu.dma_semaphore, #tpu.memory_space<semaphore_mem>>) src(%56 : memref<1x32xf32, #tpu.memory_space<any>>) dst(%57 : memref<1x32xf32, #tpu.memory_space<vmem>>)
    %c5_i32_44 = arith.constant 5 : i32
    %c0_i32_45 = arith.constant 0 : i32
    %60 = tpu.memref_slice %arg2[%25, %c0_i32_45] : memref<256x32xf32, #tpu.memory_space<any>> -> memref<1x32xf32, #tpu.memory_space<any>>
    %c5_i32_46 = arith.constant 5 : i32
    %c0_i32_47 = arith.constant 0 : i32
    %61 = tpu.memref_slice %arg5[%c5_i32_46, %c0_i32_47] : memref<8x32xf32, #tpu.memory_space<vmem>> -> memref<1x32xf32, #tpu.memory_space<vmem>>
    %62 = tpu.memref_slice %arg6[%c5_i32_44] : memref<8x!tpu.dma_semaphore, #tpu.memory_space<semaphore_mem>> -> memref<1x!tpu.dma_semaphore, #tpu.memory_space<semaphore_mem>>
    %63 = tpu.memref_squeeze %62 : memref<1x!tpu.dma_semaphore, #tpu.memory_space<semaphore_mem>> -> memref<!tpu.dma_semaphore, #tpu.memory_space<semaphore_mem>>
    tpu.wait_dma2 semaphore(%63 : memref<!tpu.dma_semaphore, #tpu.memory_space<semaphore_mem>>) src(%60 : memref<1x32xf32, #tpu.memory_space<any>>) dst(%61 : memref<1x32xf32, #tpu.memory_space<vmem>>)
    %c6_i32_48 = arith.constant 6 : i32
    %c0_i32_49 = arith.constant 0 : i32
    %64 = tpu.memref_slice %arg2[%30, %c0_i32_49] : memref<256x32xf32, #tpu.memory_space<any>> -> memref<1x32xf32, #tpu.memory_space<any>>
    %c6_i32_50 = arith.constant 6 : i32
    %c0_i32_51 = arith.constant 0 : i32
    %65 = tpu.memref_slice %arg5[%c6_i32_50, %c0_i32_51] : memref<8x32xf32, #tpu.memory_space<vmem>> -> memref<1x32xf32, #tpu.memory_space<vmem>>
    %66 = tpu.memref_slice %arg6[%c6_i32_48] : memref<8x!tpu.dma_semaphore, #tpu.memory_space<semaphore_mem>> -> memref<1x!tpu.dma_semaphore, #tpu.memory_space<semaphore_mem>>
    %67 = tpu.memref_squeeze %66 : memref<1x!tpu.dma_semaphore, #tpu.memory_space<semaphore_mem>> -> memref<!tpu.dma_semaphore, #tpu.memory_space<semaphore_mem>>
    tpu.wait_dma2 semaphore(%67 : memref<!tpu.dma_semaphore, #tpu.memory_space<semaphore_mem>>) src(%64 : memref<1x32xf32, #tpu.memory_space<any>>) dst(%65 : memref<1x32xf32, #tpu.memory_space<vmem>>)
    %c7_i32_52 = arith.constant 7 : i32
    %c0_i32_53 = arith.constant 0 : i32
    %68 = tpu.memref_slice %arg2[%35, %c0_i32_53] : memref<256x32xf32, #tpu.memory_space<any>> -> memref<1x32xf32, #tpu.memory_space<any>>
    %c7_i32_54 = arith.constant 7 : i32
    %c0_i32_55 = arith.constant 0 : i32
    %69 = tpu.memref_slice %arg5[%c7_i32_54, %c0_i32_55] : memref<8x32xf32, #tpu.memory_space<vmem>> -> memref<1x32xf32, #tpu.memory_space<vmem>>
    %70 = tpu.memref_slice %arg6[%c7_i32_52] : memref<8x!tpu.dma_semaphore, #tpu.memory_space<semaphore_mem>> -> memref<1x!tpu.dma_semaphore, #tpu.memory_space<semaphore_mem>>
    %71 = tpu.memref_squeeze %70 : memref<1x!tpu.dma_semaphore, #tpu.memory_space<semaphore_mem>> -> memref<!tpu.dma_semaphore, #tpu.memory_space<semaphore_mem>>
    tpu.wait_dma2 semaphore(%71 : memref<!tpu.dma_semaphore, #tpu.memory_space<semaphore_mem>>) src(%68 : memref<1x32xf32, #tpu.memory_space<any>>) dst(%69 : memref<1x32xf32, #tpu.memory_space<vmem>>)
    %c0_56 = arith.constant 0 : index
    %c0_57 = arith.constant 0 : index
    %72 = vector.load %arg5[%c0_56, %c0_57] : memref<8x32xf32, #tpu.memory_space<vmem>>, vector<8x32xf32>
    %cst = arith.constant dense<0.000000e+00> : vector<32xf32>
    %73 = vector.multi_reduction <add>, %72, %cst [0] : vector<8x32xf32> to vector<32xf32>
    %74 = vector.shape_cast %73 : vector<32xf32> to vector<1x32xf32>
    %cst_58 = arith.constant 8.000000e+00 : f32
    %75 = vector.broadcast %cst_58 : f32 to vector<1x32xf32>
    %76 = arith.divf %74, %75 : vector<1x32xf32>
    %c0_59 = arith.constant 0 : index
    %c0_60 = arith.constant 0 : index
    %77 = vector.load %arg3[%c0_59, %c0_60] : memref<32x256xf32, #tpu.memory_space<vmem>>, vector<32x256xf32>
    %cst_61 = arith.constant dense<0.000000e+00> : vector<1x256xf32>
    %78 = tpu.matmul %76, %77, %cst_61 {dimension_numbers = #tpu.dot_dimension_numbers<[1], [0], [0], [1], [0, 0, 1, 1], [], []>} : vector<1x32xf32>, vector<32x256xf32>, vector<1x256xf32> -> vector<1x256xf32>
    %c0_62 = arith.constant 0 : index
    %c0_63 = arith.constant 0 : index
    %79 = vector.load %arg4[%c0_62, %c0_63] : memref<1x256xf32, #tpu.memory_space<vmem>>, vector<1x256xf32>
    tpu.vector_store %arg4[%c0_62, %c0_63], %78 {strides = array<i32>} : memref<1x256xf32, #tpu.memory_space<vmem>>, vector<1x256xf32>,
    return
  }
  func.func @transform_1(%arg0: i32, %arg1: memref<8xi32, #tpu.memory_space<smem>>) -> (i32, i32) {
    %c0_i32 = arith.constant 0 : i32
    %c0_i32_0 = arith.constant 0 : i32
    return %c0_i32, %arg0 : i32, i32
  }
  func.func @transform_2(%arg0: i32, %arg1: memref<8xi32, #tpu.memory_space<smem>>) -> (i32, i32) {
    %c0_i32 = arith.constant 0 : i32
    %c0_i32_0 = arith.constant 0 : i32
    return %c0_i32, %arg0 : i32, i32
  }
}

</mosaic_0001>

<llo_original>
// kernel: tpu_custom_call.1
$region0: #{tpu_custom_call.1}
  #allocation0 [shape = 'u32[]', space=smem, size = 0x4, offset = 0x4, fixed_abs, tag = 'smem constant byte address 0x4 - core index']
  #allocation1 [shape = 'u32[144,128]{1,0:T(1,128)}', space=vmem, size = 0x12000, scoped, tag = 'internal scratch']
  #allocation2 [shape = 'f32[8,32]{1,0:T(8,128)}', space=vmem, size = 0x1000, scoped, tag = 'scratch operand']
  #allocation3 [shape = 's32[8]{0}', space=sflag, size = 0x20, scoped, tag = 'scratch operand']
  #allocation4 [shape = 's32[1]{0}', space=sflag, size = 0x4, scoped, tag = 'scoped memory for tpu_custom_call.1']
  #allocation5 [shape = 'u8[512]{0}', space=smem, size = 0x200, scoped, tag = 'prefetched SMEM operand 0']
  #allocation10 [shape = 's32[]', space=sflag, size = 0x4, offset = 0, fixed_abs, tag = 'sflag constant byte address 0x0 - dummy sync flag']
  #allocation11 [shape = 's32[]', space=sflag, size = 0x4, offset = 0, fixed_abs, tag = 'sflag constant byte address 0x0 - dummy sync flag']
  #allocation12 [shape = 'u32[]', space=smem, size = 0x4, offset = 0x44, fixed_abs, tag = 'smem constant byte address 0x44 - assertion arg 0']
  #allocation13 [shape = 'u32[]', space=smem, size = 0x4, offset = 0x48, fixed_abs, tag = 'smem constant byte address 0x48 - assertion arg 1']
  #allocation14 [shape = 's32[]', space=sflag, size = 0x4, offset = 0, fixed_abs, tag = 'sflag constant byte address 0x0 - dummy sync flag']
  #allocation15 [shape = 's32[]', space=sflag, size = 0x4, offset = 0, fixed_abs, tag = 'sflag constant byte address 0x0 - dummy sync flag']
  #allocation16 [shape = 's32[]', space=sflag, size = 0x4, offset = 0, fixed_abs, tag = 'sflag constant byte address 0x0 - dummy sync flag']
  #allocation17 [shape = 's32[]', space=sflag, size = 0x4, offset = 0, fixed_abs, tag = 'sflag constant byte address 0x0 - dummy sync flag']
  #allocation18 [shape = 's32[]', space=sflag, size = 0x4, offset = 0, fixed_abs, tag = 'sflag constant byte address 0x0 - dummy sync flag']
  #allocation19 [shape = 's32[]', space=sflag, size = 0x4, offset = 0, fixed_abs, tag = 'sflag constant byte address 0x0 - dummy sync flag']
  #allocation20 [shape = 's32[]', space=sflag, size = 0x4, offset = 0, fixed_abs, tag = 'sflag constant byte address 0x0 - dummy sync flag']
  #allocation21 [shape = 's32[]', space=sflag, size = 0x4, offset = 0, fixed_abs, tag = 'sflag constant byte address 0x0 - dummy sync flag']
  #allocation22 [shape = 's32[]', space=sflag, size = 0x4, offset = 0, fixed_abs, tag = 'sflag constant byte address 0x0 - dummy sync flag']
  #allocation23 [shape = 's32[]', space=sflag, size = 0x4, offset = 0, fixed_abs, tag = 'sflag constant byte address 0x0 - dummy sync flag']
  #allocation24 [shape = 's32[]', space=sflag, size = 0x4, offset = 0, fixed_abs, tag = 'sflag constant byte address 0x0 - dummy sync flag']
  #allocation25 [shape = 's32[]', space=sflag, size = 0x4, offset = 0, fixed_abs, tag = 'sflag constant byte address 0x0 - dummy sync flag']
  #allocation26 [shape = 's32[]', space=sflag, size = 0x4, offset = 0, fixed_abs, tag = 'sflag constant byte address 0x0 - dummy sync flag']
  #allocation27 [shape = 's32[]', space=sflag, size = 0x4, offset = 0, fixed_abs, tag = 'sflag constant byte address 0x0 - dummy sync flag']
  %s0 = inlined_call_operand.hbm [shape: s32[8], index: 0, kind: input, shape index: {}]
  %s1 = inlined_call_operand.hbm [shape: f32[256,32], index: 1, kind: input, shape index: {}]
  %s2 = inlined_call_operand.hbm [shape: f32[32,256], index: 2, kind: input, shape index: {}]
  %s3 = inlined_call_operand.hbm [shape: f32[1,256], index: 3, kind: output, shape index: {}]
  %s4 = sld [smem:[#allocation0]]
  $region50: #{tpu_custom_call.1} parent=0
    _
  %s6 = ssub.s32 1, %s4
  %s7 = scalar_select 0, %s6, %s4
  %9 = dma.hbm_to_smem %s0, 16, [#allocation5], [#allocation4]
  %10 = dma.done [#allocation4], 16
  %11 = sfence
  $region1: #{tpu_custom_call.1} parent=0
    #allocation6 [shape = 'u8[32768]{0}', space=vmem, size = 0x8000, scoped, tag = 'input window, operand 2, single buffered']
    #allocation7 [shape = 's32[1]{0}', space=sflag, size = 0x4, scoped, tag = 'scoped memory for tpu_custom_call.1']
    #allocation8 [shape = 's32[1]{0}', space=sflag, size = 0x4, scoped, tag = 'scoped memory for tpu_custom_call.1']
    #allocation9 [shape = 'u8[1024]{0}', space=vmem, size = 0x400, scoped, tag = 'output window, operand 0, single buffered']
    %12 = vsyncpa [#allocation7], 0
    %13 = vsyncpa [#allocation8], 0
    // Predicated region
    $region2: #{tpu_custom_call.1} parent=1 // pred_check
      _
    $region3: #{tpu_custom_call.1} parent=1 // pred_check_branch
      %15 = sbr.rel (0) target = $region5
    $region4: #{tpu_custom_call.1} parent=1 // pred_region
      %s17 = ssub.s32 1024, 1024
      %18 = vsyncadd [#allocation7], %s17
      %s19 = sshll.u32 [#allocation6], 4
      %s20 = int_to_ptr.vmem [resolvable:$true] %s19
      %25 = dma.hbm_to_vmem [thread:$0]  %s2, 1024, %s20, [#allocation7], 256, 256, 16
    $region5: #{tpu_custom_call.1} parent=1 // pred_fallthru
      _
    // Predicated region
    $region6: #{tpu_custom_call.1} parent=1 // pred_check
      _
    $region7: #{tpu_custom_call.1} parent=1 // pred_check_branch
      %27 = sbr.rel (0) target = $region9
    $region8: #{tpu_custom_call.1} parent=1 // pred_region
      %28 = dma.done [#allocation7], 1024
    $region9: #{tpu_custom_call.1} parent=1 // pred_fallthru
      _
    %s29 = sld [smem:[#allocation5]]
    %s30 = smul.addr %s29, 16
    %s31 = scalar_lea.hbm %s1, %s30
    // Predicated region
    $region10: #{tpu_custom_call.1} parent=1 // pred_check
      _
    $region11: #{tpu_custom_call.1} parent=1 // pred_check_branch
      %33 = sbr.rel target = $region13
    $region12: #{tpu_custom_call.1} parent=1 // pred_region
      %34 = sst [smem:[#allocation12]] [#allocation11]
      %35 = sst [smem:[#allocation13]] [#allocation10]
    $region13: #{tpu_custom_call.1} parent=1 // pred_fallthru
      _
    %37 = shalt.err (0)
    %s39 = sshll.u32 [#allocation2], 4
    %s40 = int_to_ptr.vmem [resolvable:$true] %s39
    %42 = dma.hbm_to_vmem [thread:$0]  %s31, 16, %s40, [#allocation3]
    %s43 = sld [smem:[#allocation5 + $0x1]]
    %s44 = smul.addr %s43, 16
    %s45 = scalar_lea.hbm %s1, %s44
    %s46 = scalar_lea.vmem [#allocation2], 1
    %s47 = scalar_lea.sflag [#allocation3], 1
    // Predicated region
    $region14: #{tpu_custom_call.1} parent=1 // pred_check
      _
    $region15: #{tpu_custom_call.1} parent=1 // pred_check_branch
      %49 = sbr.rel target = $region17
    $region16: #{tpu_custom_call.1} parent=1 // pred_region
      %50 = sst [smem:[#allocation12]] [#allocation15]
      %51 = sst [smem:[#allocation13]] [#allocation14]
    $region17: #{tpu_custom_call.1} parent=1 // pred_fallthru
      _
    %53 = shalt.err (0)
    %s55 = sshll.u32 %s46, 4
    %s56 = int_to_ptr.vmem [resolvable:$true] %s55
    %58 = dma.hbm_to_vmem [thread:$0]  %s45, 16, %s56, %s47
    %s59 = sld [smem:[#allocation5 + $0x2]]
    %s60 = smul.addr %s59, 16
    %s61 = scalar_lea.hbm %s1, %s60
    %s62 = scalar_lea.vmem [#allocation2], 2
    %s63 = scalar_lea.sflag [#allocation3], 2
    // Predicated region
    $region18: #{tpu_custom_call.1} parent=1 // pred_check
      _
    $region19: #{tpu_custom_call.1} parent=1 // pred_check_branch
      %65 = sbr.rel target = $region21
    $region20: #{tpu_custom_call.1} parent=1 // pred_region
      %66 = sst [smem:[#allocation12]] [#allocation17]
      %67 = sst [smem:[#allocation13]] [#allocation16]
    $region21: #{tpu_custom_call.1} parent=1 // pred_fallthru
      _
    %69 = shalt.err (0)
    %s71 = sshll.u32 %s62, 4
    %s72 = int_to_ptr.vmem [resolvable:$true] %s71
    %74 = dma.hbm_to_vmem [thread:$0]  %s61, 16, %s72, %s63
    %s75 = sld [smem:[#allocation5 + $0x3]]
    %s76 = smul.addr %s75, 16
    %s77 = scalar_lea.hbm %s1, %s76
    %s78 = scalar_lea.vmem [#allocation2], 3
    %s79 = scalar_lea.sflag [#allocation3], 3
    // Predicated region
    $region22: #{tpu_custom_call.1} parent=1 // pred_check
      _
    $region23: #{tpu_custom_call.1} parent=1 // pred_check_branch
      %81 = sbr.rel target = $region25
    $region24: #{tpu_custom_call.1} parent=1 // pred_region
      %82 = sst [smem:[#allocation12]] [#allocation19]
      %83 = sst [smem:[#allocation13]] [#allocation18]
    $region25: #{tpu_custom_call.1} parent=1 // pred_fallthru
      _
    %85 = shalt.err (0)
    %s87 = sshll.u32 %s78, 4
    %s88 = int_to_ptr.vmem [resolvable:$true] %s87
    %90 = dma.hbm_to_vmem [thread:$0]  %s77, 16, %s88, %s79
    %s91 = sld [smem:[#allocation5 + $0x4]]
    %s92 = smul.addr %s91, 16
    %s93 = scalar_lea.hbm %s1, %s92
    %s94 = scalar_lea.vmem [#allocation2], 4
    %s95 = scalar_lea.sflag [#allocation3], 4
    // Predicated region
    $region26: #{tpu_custom_call.1} parent=1 // pred_check
      _
    $region27: #{tpu_custom_call.1} parent=1 // pred_check_branch
      %97 = sbr.rel target = $region29
    $region28: #{tpu_custom_call.1} parent=1 // pred_region
      %98 = sst [smem:[#allocation12]] [#allocation21]
      %99 = sst [smem:[#allocation13]] [#allocation20]
    $region29: #{tpu_custom_call.1} parent=1 // pred_fallthru
      _
    %101 = shalt.err (0)
    %s103 = sshll.u32 %s94, 4
    %s104 = int_to_ptr.vmem [resolvable:$true] %s103
    %106 = dma.hbm_to_vmem [thread:$0]  %s93, 16, %s104, %s95
    %s107 = sld [smem:[#allocation5 + $0x5]]
    %s108 = smul.addr %s107, 16
    %s109 = scalar_lea.hbm %s1, %s108
    %s110 = scalar_lea.vmem [#allocation2], 5
    %s111 = scalar_lea.sflag [#allocation3], 5
    // Predicated region
    $region30: #{tpu_custom_call.1} parent=1 // pred_check
      _
    $region31: #{tpu_custom_call.1} parent=1 // pred_check_branch
      %113 = sbr.rel target = $region33
    $region32: #{tpu_custom_call.1} parent=1 // pred_region
      %114 = sst [smem:[#allocation12]] [#allocation23]
      %115 = sst [smem:[#allocation13]] [#allocation22]
    $region33: #{tpu_custom_call.1} parent=1 // pred_fallthru
      _
    %117 = shalt.err (0)
    %s119 = sshll.u32 %s110, 4
    %s120 = int_to_ptr.vmem [resolvable:$true] %s119
    %122 = dma.hbm_to_vmem [thread:$0]  %s109, 16, %s120, %s111
    %s123 = sld [smem:[#allocation5 + $0x6]]
    %s124 = smul.addr %s123, 16
    %s125 = scalar_lea.hbm %s1, %s124
    %s126 = scalar_lea.vmem [#allocation2], 6
    %s127 = scalar_lea.sflag [#allocation3], 6
    // Predicated region
    $region34: #{tpu_custom_call.1} parent=1 // pred_check
      _
    $region35: #{tpu_custom_call.1} parent=1 // pred_check_branch
      %129 = sbr.rel target = $region37
    $region36: #{tpu_custom_call.1} parent=1 // pred_region
      %130 = sst [smem:[#allocation12]] [#allocation25]
      %131 = sst [smem:[#allocation13]] [#allocation24]
    $region37: #{tpu_custom_call.1} parent=1 // pred_fallthru
      _
    %133 = shalt.err (0)
    %s135 = sshll.u32 %s126, 4
    %s136 = int_to_ptr.vmem [resolvable:$true] %s135
    %138 = dma.hbm_to_vmem [thread:$0]  %s125, 16, %s136, %s127
    %s139 = sld [smem:[#allocation5 + $0x7]]
    %s140 = smul.addr %s139, 16
    %s141 = scalar_lea.hbm %s1, %s140
    %s142 = scalar_lea.vmem [#allocation2], 7
    %s143 = scalar_lea.sflag [#allocation3], 7
    // Predicated region
    $region38: #{tpu_custom_call.1} parent=1 // pred_check
      _
    $region39: #{tpu_custom_call.1} parent=1 // pred_check_branch
      %145 = sbr.rel target = $region41
    $region40: #{tpu_custom_call.1} parent=1 // pred_region
      %146 = sst [smem:[#allocation12]] [#allocation27]
      %147 = sst [smem:[#allocation13]] [#allocation26]
    $region41: #{tpu_custom_call.1} parent=1 // pred_fallthru
      _
    %149 = shalt.err (0)
    %s151 = sshll.u32 %s142, 4
    %s152 = int_to_ptr.vmem [resolvable:$true] %s151
    %154 = dma.hbm_to_vmem [thread:$0]  %s141, 16, %s152, %s143
    %s155 = smul.u32 1, 1
    %s156 = sshll.u32 %s155, 4
    %157 = dma.done [#allocation3], %s156
    %s158 = sshll.u32 %s155, 4
    %159 = dma.done %s47, %s158
    %s160 = sshll.u32 %s155, 4
    %161 = dma.done %s63, %s160
    %s162 = sshll.u32 %s155, 4
    %163 = dma.done %s79, %s162
    %s164 = sshll.u32 %s155, 4
    %165 = dma.done %s95, %s164
    %s166 = sshll.u32 %s155, 4
    %167 = dma.done %s111, %s166
    %s168 = sshll.u32 %s155, 4
    %169 = dma.done %s127, %s168
    %s170 = sshll.u32 %s155, 4
    %171 = dma.done %s143, %s170
    %v172 = vld [vmem:[#allocation2] sm:$0xff]
    %vm173 = vcmask 261120
    %v174 = vsel %vm173, %v172, 0.0
    %v175 = vrot.slane %v174, 4
    %v176 = vadd.f32 %v174, %v175
    %v177 = vrot.slane %v176, 2
    %v178 = vadd.f32 %v176, %v177
    %v179 = vrot.slane %v178, 1
    %v180 = vadd.f32 %v178, %v179
    %v181 = vrcp.pop 8.0
    %v182 = vmul.f32 %v180, %v181
    %v183 = vld [vmem:[#allocation6] sm:$0xff]
    %v184 = vld [vmem:[#allocation6 + $0x8] sm:$0xff]
    %v185 = vld [vmem:[#allocation6 + $0x10] sm:$0xff]
    %v186 = vld [vmem:[#allocation6 + $0x18] sm:$0xff]
    %v187 = vld [vmem:[#allocation6 + $0x20] sm:$0xff]
    %v188 = vld [vmem:[#allocation6 + $0x28] sm:$0xff]
    %v189 = vld [vmem:[#allocation6 + $0x30] sm:$0xff]
    %v190 = vld [vmem:[#allocation6 + $0x38] sm:$0xff]
    %v192 = vsel %vm173, %v182, 0
    %194 = vmatprep.subr.mxu0 %v184
    %195 = vmatpush1.msra.mxu0 %v183
    %196 = vmatprep.subr.mxu0 %v186
    %197 = vmatpush1.msra.mxu0 %v185
    %198 = vmatprep.subr.mxu0 %v188
    %199 = vmatpush1.msra.mxu0 %v187
    %200 = vmatprep.subr.mxu0 %v190
    %201 = vmatpush1.msra.mxu0 %v189
    %202 = vmatprep.subr.mxu0 0.0
    %203 = vmatpush1.msra.mxu0 0.0
    %204 = vmatprep.subr.mxu0 0.0
    %205 = vmatpush1.msra.mxu0 0.0
    %206 = vmatprep.subr.mxu0 0.0
    %207 = vmatpush1.msra.mxu0 0.0
    %208 = vmatprep.subr.mxu0 0.0
    %209 = vmatpush1.msra.mxu0 0.0
    %210 = vmatprep.subr.mxu0 0.0
    %211 = vmatpush1.msra.mxu0 0.0
    %212 = vmatprep.subr.mxu0 0.0
    %213 = vmatpush1.msra.mxu0 0.0
    %214 = vmatprep.subr.mxu0 0.0
    %215 = vmatpush1.msra.mxu0 0.0
    %216 = vmatprep.subr.mxu0 0.0
    %217 = vmatpush1.msra.mxu0 0.0
    %218 = vmatprep.subr.mxu0 0.0
    %219 = vmatpush1.msra.mxu0 0.0
    %220 = vmatprep.subr.mxu0 0.0
    %221 = vmatpush1.msra.mxu0 0.0
    %222 = vmatprep.subr.mxu0 0.0
    %223 = vmatpush1.msra.mxu0 0.0
    %224 = vmatprep.subr.mxu0 0.0
    %225 = vmatpush1.msra.mxu0 0.0
    %226 = vmatprep.subr.mxu0 0.0
    %227 = vmatpush1.msra.mxu0 0.0
    %228 = vmatprep.subr.mxu0 0.0
    %229 = vmatpush1.msra.mxu0 0.0
    %230 = vmatprep.subr.mxu0 0.0
    %231 = vmatpush1.msra.mxu0 0.0
    %232 = vmatprep.subr.mxu0 0.0
    %233 = vmatpush1.msra.mxu0 0.0
    %234 = vmatprep.subr.mxu0 0.0
    %235 = vmatpush1.msra.mxu0 0.0
    %236 = vmatprep.subr.mxu0 0.0
    %237 = vmatpush1.msra.mxu0 0.0
    %238 = vmatprep.subr.mxu0 0.0
    %239 = vmatpush1.msra.mxu0 0.0
    %240 = vmatprep.subr.mxu0 0.0
    %241 = vmatpush1.msra.mxu0 0.0
    %242 = vmatprep.subr.mxu0 0.0
    %243 = vmatpush1.msra.mxu0 0.0
    %244 = vmatprep.subr.mxu0 0.0
    %245 = vmatpush1.msra.mxu0 0.0
    %246 = vmatprep.subr.mxu0 0.0
    %247 = vmatpush1.msra.mxu0 0.0
    %248 = vmatprep.subr.mxu0 0.0
    %249 = vmatpush1.msra.mxu0 0.0
    %250 = vmatprep.subr.mxu0 0.0
    %251 = vmatpush1.msra.mxu0 0.0
    %252 = vmatprep.subr.mxu0 0.0
    %253 = vmatpush1.msra.mxu0 0.0
    %254 = vmatprep.subr.mxu0 0.0
    %255 = vmatpush1.msra.mxu0 0.0
    %256 = vmatprep.subr.mxu0 0.0
    %257 = vmatpush1.msra.mxu0 0.0
    %258 = vmatprep.mubr.f32.mxu0 0.0
    %259 = vmatmul.mubr.f32.gmra.mrb[0].mxu0 %v192
    %v260 = vpop.f32.mrb[0].mxu0
    %v261 = vadd.f32 0.0, %v260
    %v262 = vpop.f32.mrb[0].mxu0
    %v263 = vadd.f32 0.0, %v262
    %264 = vdwg.mxu0
    %v267 = vcombine.low %v261, %v263
    %v269 = vunpack.c.l.s4 1966171168
    %v270 = vunpack.c.0.s8 %v269
    %v271 = vlaneseq
    %v272 = vshrl.u32 %v271, 7
    %v273 = vsub.s32 %v270, %v272
    %v274 = vrot.slane %v267, %v273
    %v276 = vunpack.c.l.s4 1966171168
    %v277 = vunpack.c.0.s8 %v276
    %v278 = vlaneseq
    %v279 = vshrl.u32 %v278, 7
    %v280 = vsub.s32 %v277, %v279
    %v281 = vrot.slane %v274, %v280
    %v283 = vlaneseq
    %vm284 = vcmp.ge.s32.totalorder %v283, 0
    %vm285 = vcmp.lt.s32.totalorder %v283, 256
    %vm286 = vmand %vm284, %vm285
    %287 = vst.msk [vmem:[#allocation9] sm:$0x3] %vm286, %v281
    // Predicated region
    $region42: #{tpu_custom_call.1} parent=1 // pred_check
      _
    $region43: #{tpu_custom_call.1} parent=1 // pred_check_branch
      %289 = sbr.rel (0) target = $region45
    $region44: #{tpu_custom_call.1} parent=1 // pred_region
      %s291 = ssub.s32 32, 32
      %292 = vsyncadd [#allocation8], %s291
      %s294 = sshll.u32 [#allocation9], 4
      %s295 = int_to_ptr.vmem [resolvable:$true] %s294
      %297 = dma.vmem_to_hbm [thread:$0]  %s295, 32, %s3, [#allocation8]
    $region45: #{tpu_custom_call.1} parent=1 // pred_fallthru
      _
    // Predicated region
    $region46: #{tpu_custom_call.1} parent=1 // pred_check
      _
    $region47: #{tpu_custom_call.1} parent=1 // pred_check_branch
      %299 = sbr.rel (0) target = $region49
    $region48: #{tpu_custom_call.1} parent=1 // pred_region
      %300 = dma.done [#allocation8], 32
    $region49: #{tpu_custom_call.1} parent=1 // pred_fallthru
      _
    %301 = vsyncpa [#allocation7], 1
    %302 = vsyncpa [#allocation8], 1
  %303 = vsyncmov [#allocation3]
  %s304 = vpop.sfrf %303
  %p305 = scmp.eq.s32.totalorder %s304, 0
  %p306 = pneg %p305
  %308 = shalt.err (%p306)
  %s309 = scalar_lea.sflag [#allocation3], 1
  %310 = vsyncmov %s309
  %s311 = vpop.sfrf %310
  %p312 = scmp.eq.s32.totalorder %s311, 0
  %p313 = pneg %p312
  %315 = shalt.err (%p313)
  %s316 = scalar_lea.sflag [#allocation3], 2
  %317 = vsyncmov %s316
  %s318 = vpop.sfrf %317
  %p319 = scmp.eq.s32.totalorder %s318, 0
  %p320 = pneg %p319
  %322 = shalt.err (%p320)
  %s323 = scalar_lea.sflag [#allocation3], 3
  %324 = vsyncmov %s323
  %s325 = vpop.sfrf %324
  %p326 = scmp.eq.s32.totalorder %s325, 0
  %p327 = pneg %p326
  %329 = shalt.err (%p327)
  %s330 = scalar_lea.sflag [#allocation3], 4
  %331 = vsyncmov %s330
  %s332 = vpop.sfrf %331
  %p333 = scmp.eq.s32.totalorder %s332, 0
  %p334 = pneg %p333
  %336 = shalt.err (%p334)
  %s337 = scalar_lea.sflag [#allocation3], 5
  %338 = vsyncmov %s337
  %s339 = vpop.sfrf %338
  %p340 = scmp.eq.s32.totalorder %s339, 0
  %p341 = pneg %p340
  %343 = shalt.err (%p341)
  %s344 = scalar_lea.sflag [#allocation3], 6
  %345 = vsyncmov %s344
  %s346 = vpop.sfrf %345
  %p347 = scmp.eq.s32.totalorder %s346, 0
  %p348 = pneg %p347
  %350 = shalt.err (%p348)
  %s351 = scalar_lea.sflag [#allocation3], 7
  %352 = vsyncmov %s351
  %s353 = vpop.sfrf %352
  %p354 = scmp.eq.s32.totalorder %s353, 0
  %p355 = pneg %p354
  %357 = shalt.err (%p355)

</llo_original>
